<compile_context>
chip_gen: v7x
topology: tpu7x:2x2x1
jax: 0.10.0
libtpu: 0.0.40
codegen_flags: <defaults>
</compile_context>

<pallas_src>
import jax
import jax.numpy as jnp
from jax.experimental import pallas as pl
from jax.experimental.pallas import tpu as pltpu


def _cdiv(a: int, b: int) -> int:
    return -(-a // b)


def _temp_scale_kernel(inv_t_ref, x_ref, o_ref):
    # inv_t_ref: (1,) f32 scalar in SMEM (1/temperature, computed once in the
    # wrapper).  x_ref / o_ref: VMEM tiles.  For sub-32-bit inputs the multiply
    # promotes to f32; only the result is cast back (no double rounding).
    o_ref[...] = (x_ref[...] * inv_t_ref[0]).astype(o_ref.dtype)


def _vmem_capacity_bytes() -> int:
    """Trace-time VMEM capacity; conservative (v7x, 64 MiB per-TC) fallback."""
    try:
        cap = getattr(pltpu.get_tpu_info(), "vmem_capacity_bytes", None)
        if cap:
            return int(cap)
    except Exception:
        pass
    return 64 * 1024 * 1024


def _sublane_rows(dtype) -> int:
    return {4: 8, 2: 16, 1: 32}.get(jnp.dtype(dtype).itemsize, 8)


def _scale_2d(x2d: jax.Array, inv_t: jax.Array) -> jax.Array:
    rows, lanes = x2d.shape
    itemsize = jnp.dtype(x2d.dtype).itemsize
    sub = _sublane_rows(x2d.dtype)

    vmem_cap = _vmem_capacity_bytes()
    # Scoped VMEM: half of physical, capped at 64 MiB (v5e/v6e: 64, v7x: 32).
    vmem_limit = min(vmem_cap // 2, 64 * 1024 * 1024)
    # in + out, double-buffered => ~4x block bytes resident; leave headroom.
    block_target = max(64 * 1024, min(vmem_limit // 8, 16 * 1024 * 1024))
    # v7x has two TensorCores: want >= 2 pipelined steps per core.
    min_steps = 4 if vmem_cap <= 64 * 1024 * 1024 else 2

    # ---- lane tile: full extent unless the input is too wide to fit ----
    # (when lanes % 128 != 0 the block MUST use the full last dim; that case is
    # small classification heads in practice, so no lane tiling is needed.)
    if lanes % 128 == 0 and lanes * itemsize * sub > block_target:
        tl = min(lanes, max(128, (block_target // (sub * itemsize)) // 128 * 128))
    else:
        tl = lanes
    lane_steps = _cdiv(lanes, tl)

    # ---- row tile: largest sublane-aligned tile within the block budget ----
    if rows <= sub:
        tb = rows  # full-extent rows (also handles rows % sublane != 0)
    else:
        row_bytes = max(tl * itemsize, 1)
        tb = max(sub, (block_target // row_bytes) // sub * sub)
        # Keep >= min_steps total grid steps so the HBM<->VMEM pipeline (and
        # v7x's two TensorCores) are actually used, when the data allows it.
        want_row_steps = _cdiv(min_steps, lane_steps)
        if want_row_steps > 1 and rows >= want_row_steps * sub:
            tb = min(tb, max(sub, ((rows // want_row_steps) // sub) * sub))
        if tb >= rows:
            tb = rows  # single full-extent row block
    grid = (_cdiv(rows, tb), lane_steps)

    cost = pl.CostEstimate(
        flops=rows * lanes,
        transcendentals=0,
        bytes_accessed=2 * rows * lanes * itemsize,
    )

    return pl.pallas_call(
        _temp_scale_kernel,
        out_shape=jax.ShapeDtypeStruct((rows, lanes), x2d.dtype),
        grid_spec=pl.GridSpec(
            grid=grid,
            in_specs=[
                # 1/temperature stays in SMEM, same (whole) block every step.
                pl.BlockSpec(memory_space=pltpu.MemorySpace.SMEM),
                pl.BlockSpec((tb, tl), lambda i, j: (i, j)),
            ],
            out_specs=pl.BlockSpec((tb, tl), lambda i, j: (i, j)),
        ),
        compiler_params=pltpu.CompilerParams(
            dimension_semantics=("parallel", "parallel"),
            vmem_limit_bytes=vmem_limit,
        ),
        cost_estimate=cost,
    )(inv_t, x2d)


def temperature_scale(logits: jax.Array, temperature: jax.Array) -> jax.Array:
    """Equivalent of TemperatureScaler.forward(logits) = logits / temperature.

    logits: float array of any rank; temperature: (1,) float parameter.
    """
    orig_shape = logits.shape
    if logits.size == 0:
        return logits

    # Reciprocal hoisted out of the kernel body: one scalar divide, in f32.
    inv_t = 1.0 / temperature.reshape(-1)[:1].astype(jnp.float32)

    if logits.ndim >= 2:
        # Collapse leading dims (free for contiguous data); keep the class /
        # vocab dim as the (possibly full-extent) lane dim.
        x2d = logits.reshape(-1, orig_shape[-1])
    else:
        # Truly 1-D (or 0-D) input: lane-dense slab when divisible, else a
        # single full-extent row (tiny edge case, masked stores are fine).
        n = int(logits.size)
        if n % 512 == 0:
            x2d = logits.reshape(n // 512, 512)
        elif n % 128 == 0:
            x2d = logits.reshape(n // 128, 128)
        else:
            x2d = logits.reshape(1, n)

    out2d = _scale_2d(x2d, inv_t)
    return out2d.reshape(orig_shape)


if __name__ == "__main__":
    key = jax.random.PRNGKey(0)
    k1, k2, k3, k4, k5 = jax.random.split(key, 5)

    # TODO(synk): `calibrate` (LBFGS + cross-entropy optimization loop) is a
    # training procedure, not a forward-pass kernel; only forward() is here.

    cases = [
        jax.random.normal(k1, (8, 128), dtype=jnp.float32),     # lane-dense 2-D
        jax.random.normal(k2, (2, 4, 256), dtype=jnp.float32),  # rank-3 -> reshape(-1, C)
        jax.random.normal(k3, (6, 10), dtype=jnp.float32),      # 10-class logits, full-extent C
        jax.random.normal(k4, (64, 256), dtype=jnp.float32),    # multi-step grid
        jax.random.normal(k5, (384,), dtype=jnp.float32),       # 1-D input
    ]
    bf16_case = jax.random.normal(k1, (16, 384), dtype=jnp.bfloat16)

    # Default init matches nn.Parameter(torch.ones(1)); also check a
    # "calibrated" value so the scaling is non-trivial.
    for t_val in (1.0, 1.5):
        temperature = jnp.full((1,), t_val, dtype=jnp.float32)
        for logits in cases:
            out = jax.block_until_ready(temperature_scale(logits, temperature))
            ref = logits / temperature[0]
            assert out.shape == logits.shape and out.dtype == logits.dtype
            assert jnp.allclose(out, ref, atol=1e-6, rtol=1e-6), (t_val, logits.shape)

        out = jax.block_until_ready(temperature_scale(bf16_case, temperature))
        ref = (bf16_case.astype(jnp.float32) / t_val).astype(jnp.bfloat16)
        assert out.shape == bf16_case.shape and out.dtype == jnp.bfloat16
        assert jnp.allclose(out.astype(jnp.float32), ref.astype(jnp.float32),
                            atol=1e-2, rtol=1e-2), (t_val, bf16_case.shape)

    print("KERNEL_OK")
</pallas_src>

<mosaic_0001>
module attributes {stable_mosaic.version = 11 : i64} {
  func.func @_temp_scale_kernel(%arg0: i32, %arg1: i32, %arg2: memref<1xf32, #tpu.memory_space<smem>>, %arg3: memref<8x128xf32, #tpu.memory_space<vmem>>, %arg4: memref<8x128xf32, #tpu.memory_space<vmem>>) attributes {dimension_semantics = [#tpu.dimension_semantics<parallel>, #tpu.dimension_semantics<parallel>], iteration_bounds = array<i64: 1, 1>, scalar_prefetch = 0 : i64, scratch_operands = 0 : i64, tpu.core_type = #tpu.core_type<tc>, window_params = [{transform_indices = @transform_0, window_bounds = array<i64: 1>}, {transform_indices = @transform_1, window_bounds = array<i64: 8, 128>}, {transform_indices = @transform_2, window_bounds = array<i64: 8, 128>}]} {
    %c0 = arith.constant 0 : index
    %c0_0 = arith.constant 0 : index
    %0 = vector.load %arg3[%c0, %c0_0] : memref<8x128xf32, #tpu.memory_space<vmem>>, vector<8x128xf32>
    %c0_1 = arith.constant 0 : index
    %1 = memref.load %arg2[%c0_1] : memref<1xf32, #tpu.memory_space<smem>>
    %2 = vector.broadcast %1 : f32 to vector<8x128xf32>
    %3 = arith.mulf %0, %2 : vector<8x128xf32>
    %c0_2 = arith.constant 0 : index
    %c0_3 = arith.constant 0 : index
    %4 = vector.load %arg4[%c0_2, %c0_3] : memref<8x128xf32, #tpu.memory_space<vmem>>, vector<8x128xf32>
    tpu.vector_store %arg4[%c0_2, %c0_3], %3 {strides = array<i32>} : memref<8x128xf32, #tpu.memory_space<vmem>>, vector<8x128xf32>,
    return
  }
  func.func @transform_0(%arg0: i32, %arg1: i32) -> i32 {
    %c0_i32 = arith.constant 0 : i32
    %c0_i32_0 = arith.constant 0 : i32
    return %c0_i32 : i32
  }
  func.func @transform_1(%arg0: i32, %arg1: i32) -> (i32, i32) {
    %c0_i32 = arith.constant 0 : i32
    return %arg0, %arg1 : i32, i32
  }
  func.func @transform_2(%arg0: i32, %arg1: i32) -> (i32, i32) {
    %c0_i32 = arith.constant 0 : i32
    return %arg0, %arg1 : i32, i32
  }
}

</mosaic_0001>

<llo_original>
// kernel: tpu_custom_call.1
$region0: #{tpu_custom_call.1}
  #allocation0 [shape = 'u32[]', space=smem, size = 0x4, offset = 0x4, fixed_abs, tag = 'smem constant byte address 0x4 - core index']
  #allocation1 [shape = 'u32[144,128]{1,0:T(1,128)}', space=vmem, size = 0x12000, scoped, tag = 'internal scratch']
  #allocation2 [shape = 'f32[1]{0:T(128)S(6)}', space=smem, size = 0x200, scoped, tag = 'scoped memory for tpu_custom_call.1']
  %s0 = inlined_call_operand.<no memory space> [shape: f32[1], index: 0, kind: input, shape index: {}]
  %s1 = inlined_call_operand.hbm [shape: f32[8,128], index: 1, kind: input, shape index: {}]
  %s2 = inlined_call_operand.hbm [shape: f32[8,128], index: 2, kind: output, shape index: {}]
  %s3 = sld [smem:[#allocation0]]
  $region22: #{tpu_custom_call.1} parent=0
    _
  %s5 = ssub.s32 1, %s3
  %s6 = scalar_select 0, %s5, %s3
  %7 = sst [smem:[#allocation2]] %s0
  $region1: #{tpu_custom_call.1} parent=0
    #allocation3 [shape = 'u8[4096]{0}', space=vmem, size = 0x1000, scoped, tag = 'input window, operand 1, single buffered']
    #allocation4 [shape = 's32[1]{0}', space=sflag, size = 0x4, scoped, tag = 'scoped memory for tpu_custom_call.1']
    #allocation5 [shape = 's32[1]{0}', space=sflag, size = 0x4, scoped, tag = 'scoped memory for tpu_custom_call.1']
    #allocation6 [shape = 'u8[4096]{0}', space=vmem, size = 0x1000, scoped, tag = 'output window, operand 0, single buffered']
    %8 = vsyncpa [#allocation4], 0
    %9 = vsyncpa [#allocation5], 0
    // Predicated region
    $region2: #{tpu_custom_call.1} parent=1 // pred_check
      _
    $region3: #{tpu_custom_call.1} parent=1 // pred_check_branch
      %11 = sbr.rel (0) target = $region5
    $region4: #{tpu_custom_call.1} parent=1 // pred_region
      _
    $region5: #{tpu_custom_call.1} parent=1 // pred_fallthru
      _
    // Predicated region
    $region6: #{tpu_custom_call.1} parent=1 // pred_check
      _
    $region7: #{tpu_custom_call.1} parent=1 // pred_check_branch
      %13 = sbr.rel (0) target = $region9
    $region8: #{tpu_custom_call.1} parent=1 // pred_region
      %s15 = ssub.s32 128, 128
      %16 = vsyncadd [#allocation4], %s15
      %s18 = sshll.u32 [#allocation3], 4
      %s19 = int_to_ptr.vmem [resolvable:$true] %s18
      %21 = dma.hbm_to_vmem [thread:$0]  %s1, 128, %s19, [#allocation4]
    $region9: #{tpu_custom_call.1} parent=1 // pred_fallthru
      _
    // Predicated region
    $region10: #{tpu_custom_call.1} parent=1 // pred_check
      _
    $region11: #{tpu_custom_call.1} parent=1 // pred_check_branch
      %23 = sbr.rel (0) target = $region13
    $region12: #{tpu_custom_call.1} parent=1 // pred_region
      %24 = dma.done [#allocation4], 128
    $region13: #{tpu_custom_call.1} parent=1 // pred_fallthru
      _
    %v25 = vld [vmem:[#allocation3] sm:$0xff]
    %s26 = sld [smem:[#allocation2]]
    %v27 = vstv %s26
    %v28 = vmul.f32 %v25, %v27
    %29 = vst [vmem:[#allocation6] sm:$0xff] %v28
    // Predicated region
    $region14: #{tpu_custom_call.1} parent=1 // pred_check
      _
    $region15: #{tpu_custom_call.1} parent=1 // pred_check_branch
      %31 = sbr.rel (0) target = $region17
    $region16: #{tpu_custom_call.1} parent=1 // pred_region
      %s33 = ssub.s32 128, 128
      %34 = vsyncadd [#allocation5], %s33
      %s36 = sshll.u32 [#allocation6], 4
      %s37 = int_to_ptr.vmem [resolvable:$true] %s36
      %39 = dma.vmem_to_hbm [thread:$0]  %s37, 128, %s2, [#allocation5]
    $region17: #{tpu_custom_call.1} parent=1 // pred_fallthru
      _
    // Predicated region
    $region18: #{tpu_custom_call.1} parent=1 // pred_check
      _
    $region19: #{tpu_custom_call.1} parent=1 // pred_check_branch
      %41 = sbr.rel (0) target = $region21
    $region20: #{tpu_custom_call.1} parent=1 // pred_region
      %42 = dma.done [#allocation5], 128
    $region21: #{tpu_custom_call.1} parent=1 // pred_fallthru
      _
    %43 = vsyncpa [#allocation4], 1
    %44 = vsyncpa [#allocation5], 1

</llo_original>
